<compile_context>
chip_gen: v7x
topology: tpu7x:2x2x1
jax: 0.10.0
libtpu: 0.0.40
codegen_flags: <defaults>
</compile_context>

<pallas_src>
import math
from functools import partial

import jax
import jax.numpy as jnp
from jax.experimental import pallas as pl
from jax.experimental.pallas import tpu as pltpu


def _pe_kernel(inv_freq_ref, phase_ref, pos_off_ref, out_ref, *, pos_per_row: int):
    """Writes sin(pos * inv_freq + phase) into a (row_tile, width) tile.

    pos = (global_row * pos_per_row) + pos_off[lane]; inv_freq/phase/pos_off are
    per-lane (1, width) vectors broadcast over the row axis.
    """
    row_tile, width = out_ref.shape
    row0 = pl.program_id(0) * row_tile
    rows = (jax.lax.broadcasted_iota(jnp.int32, (row_tile, width), 0) + row0)
    pos = rows.astype(jnp.float32) * jnp.float32(pos_per_row) + pos_off_ref[...]
    angle = pos * inv_freq_ref[...] + phase_ref[...]
    out_ref[...] = jnp.sin(angle).astype(out_ref.dtype)


def _choose_row_tile(total_rows: int, width: int) -> int:
    """Largest row tile that (a) divides total_rows, (b) is a multiple of 8 (or the
    full extent), (c) keeps a double-buffered f32 tile well under the v5e 16 MiB
    scoped-VMEM default, and (d) leaves >= 2 grid steps when possible (v7x megacore)."""
    budget_rows = max(8, (4 * 1024 * 1024) // (width * 4))  # ~4 MiB per buffer
    cap = min(512, budget_rows)
    if total_rows % 8 != 0 or total_rows <= 8:
        return total_rows  # full-extent block (grid of 1) -- tiny problem
    tiles = [t for t in range(8, min(total_rows, cap) + 1, 8) if total_rows % t == 0]
    if not tiles:
        return total_rows
    multi = [t for t in tiles if total_rows // t >= 2]
    return max(multi) if multi else max(tiles)


def positional_embedding(x: jax.Array, d_model: int) -> jax.Array:
    """Returns pe[:, :x.shape[1]] of shape (1, seq_len, d_model), float32."""
    seq_len = x.shape[1]
    total = seq_len * d_model

    # Per-column frequency and phase: column j uses inv_freq[j // 2]; even columns
    # get sin (phase 0), odd columns get cos == sin(. + pi/2).
    j = jnp.arange(d_model)
    inv_freq_col = jnp.exp(
        (2.0 * (j // 2)).astype(jnp.float32) * jnp.float32(-math.log(10000.0) / d_model)
    )
    phase_col = (j % 2).astype(jnp.float32) * jnp.float32(math.pi / 2.0)

    # Pick a lane-dense layout for the computation.
    if d_model % 128 == 0:
        width, ppr = d_model, 1                      # already lane-aligned
    elif d_model < 128 and 128 % d_model == 0 and total % 128 == 0:
        width, ppr = 128, 128 // d_model             # fold ppr positions per lane row
    else:
        width, ppr = d_model, 1                      # fallback (may use masked stores)

    if ppr == 1:
        inv_freq_lane = inv_freq_col.reshape(1, width)
        phase_lane = phase_col.reshape(1, width)
        pos_off_lane = jnp.zeros((1, width), jnp.float32)
    else:
        inv_freq_lane = jnp.tile(inv_freq_col, ppr).reshape(1, width)
        phase_lane = jnp.tile(phase_col, ppr).reshape(1, width)
        pos_off_lane = jnp.repeat(
            jnp.arange(ppr, dtype=jnp.float32), d_model
        ).reshape(1, width)

    total_rows = total // width
    row_tile = _choose_row_tile(total_rows, width)
    grid = (total_rows // row_tile,)

    kernel = partial(_pe_kernel, pos_per_row=ppr)

    vec_spec = pl.BlockSpec((1, width), lambda i: (0, 0))
    flat = pl.pallas_call(
        kernel,
        out_shape=jax.ShapeDtypeStruct((total_rows, width), jnp.float32),
        grid_spec=pltpu.PrefetchScalarGridSpec(
            num_scalar_prefetch=0,
            grid=grid,
            in_specs=[vec_spec, vec_spec, vec_spec],
            out_specs=pl.BlockSpec((row_tile, width), lambda i: (i, 0)),
        ),
        compiler_params=pltpu.CompilerParams(
            dimension_semantics=("parallel",),
        ),
    )(inv_freq_lane, phase_lane, pos_off_lane)

    # Wrapper-side reshape back to the PyTorch output layout (pure layout plumbing).
    return flat.reshape(1, seq_len, d_model)


def positional_embedding_ref(seq_len: int, d_model: int) -> jnp.ndarray:
    """Pure-JAX reference replicating the PyTorch __init__ + forward."""
    position = jnp.arange(seq_len, dtype=jnp.float32)[:, None]
    div_term = jnp.exp(
        jnp.arange(0, d_model, 2, dtype=jnp.float32) * (-math.log(10000.0) / d_model)
    )
    pe = jnp.zeros((seq_len, d_model), jnp.float32)
    pe = pe.at[:, 0::2].set(jnp.sin(position * div_term))
    pe = pe.at[:, 1::2].set(jnp.cos(position * div_term))
    return pe[None, :, :]


if __name__ == "__main__":
    key = jax.random.PRNGKey(0)

    # Small shape matching the module's forward: only x.shape[1] matters.
    batch, seq_len, d_model = 2, 8, 32
    x = jax.random.normal(key, (batch, seq_len, d_model), dtype=jnp.float32)

    pe = positional_embedding(x, d_model)
    pe = jax.block_until_ready(pe)
    ref = positional_embedding_ref(seq_len, d_model)
    assert pe.shape == (1, seq_len, d_model), pe.shape
    assert pe.dtype == jnp.float32
    assert jnp.allclose(pe, ref, atol=1e-5, rtol=1e-5), "mismatch vs reference (small)"

    # Second small case exercising the multi-step tiled path (grid > 1).
    seq_len2, d_model2 = 64, 32
    x2 = jax.random.normal(key, (batch, seq_len2, d_model2), dtype=jnp.float32)
    pe2 = jax.block_until_ready(positional_embedding(x2, d_model2))
    ref2 = positional_embedding_ref(seq_len2, d_model2)
    assert pe2.shape == (1, seq_len2, d_model2)
    assert jnp.allclose(pe2, ref2, atol=1e-5, rtol=1e-5), "mismatch vs reference (tiled)"

    print("KERNEL_OK")
</pallas_src>

<mosaic_0001>
module attributes {stable_mosaic.version = 11 : i64} {
  func.func @_pe_kernel(%arg0: i32, %arg1: memref<1x128xf32, #tpu.memory_space<vmem>>, %arg2: memref<1x128xf32, #tpu.memory_space<vmem>>, %arg3: memref<1x128xf32, #tpu.memory_space<vmem>>, %arg4: memref<2x128xf32, #tpu.memory_space<vmem>>) attributes {dimension_semantics = [#tpu.dimension_semantics<parallel>], iteration_bounds = array<i64: 1>, scalar_prefetch = 0 : i64, scratch_operands = 0 : i64, tpu.core_type = #tpu.core_type<tc>, window_params = [{pipeline_mode = #tpu.pipeline_mode<synchronous>, transform_indices = @transform_0, window_bounds = array<i64: 1, 128>}, {pipeline_mode = #tpu.pipeline_mode<synchronous>, transform_indices = @transform_1, window_bounds = array<i64: 1, 128>}, {pipeline_mode = #tpu.pipeline_mode<synchronous>, transform_indices = @transform_2, window_bounds = array<i64: 1, 128>}, {transform_indices = @transform_3, window_bounds = array<i64: 2, 128>}]} {
    %c2_i32 = arith.constant 2 : i32
    %0 = arith.muli %arg0, %c2_i32 : i32
    %1 = tpu.iota {dimensions = array<i32: 0>} : vector<2x128xi32>
    %2 = vector.broadcast %0 : i32 to vector<2x128xi32>
    %3 = arith.addi %1, %2 : vector<2x128xi32>
    %4 = arith.sitofp %3 : vector<2x128xi32> to vector<2x128xf32>
    %cst = arith.constant 4.000000e+00 : f32
    %5 = vector.broadcast %cst : f32 to vector<2x128xf32>
    %6 = arith.mulf %4, %5 : vector<2x128xf32>
    %c0 = arith.constant 0 : index
    %c0_0 = arith.constant 0 : index
    %7 = vector.load %arg3[%c0, %c0_0] : memref<1x128xf32, #tpu.memory_space<vmem>>, vector<1x128xf32>
    %8 = vector.broadcast %7 : vector<1x128xf32> to vector<2x128xf32>
    %9 = arith.addf %6, %8 : vector<2x128xf32>
    %c0_1 = arith.constant 0 : index
    %c0_2 = arith.constant 0 : index
    %10 = vector.load %arg1[%c0_1, %c0_2] : memref<1x128xf32, #tpu.memory_space<vmem>>, vector<1x128xf32>
    %11 = vector.broadcast %10 : vector<1x128xf32> to vector<2x128xf32>
    %12 = arith.mulf %9, %11 : vector<2x128xf32>
    %c0_3 = arith.constant 0 : index
    %c0_4 = arith.constant 0 : index
    %13 = vector.load %arg2[%c0_3, %c0_4] : memref<1x128xf32, #tpu.memory_space<vmem>>, vector<1x128xf32>
    %14 = vector.broadcast %13 : vector<1x128xf32> to vector<2x128xf32>
    %15 = arith.addf %12, %14 : vector<2x128xf32>
    %16 = math.sin %15 : vector<2x128xf32>
    %c0_5 = arith.constant 0 : index
    %c0_6 = arith.constant 0 : index
    %17 = vector.load %arg4[%c0_5, %c0_6] : memref<2x128xf32, #tpu.memory_space<vmem>>, vector<2x128xf32>
    tpu.vector_store %arg4[%c0_5, %c0_6], %16 {strides = array<i32>} : memref<2x128xf32, #tpu.memory_space<vmem>>, vector<2x128xf32>,
    return
  }
  func.func @transform_0(%arg0: i32) -> (i32, i32) {
    %c0_i32 = arith.constant 0 : i32
    %c0_i32_0 = arith.constant 0 : i32
    %c0_i32_1 = arith.constant 0 : i32
    return %c0_i32, %c0_i32_0 : i32, i32
  }
  func.func @transform_1(%arg0: i32) -> (i32, i32) {
    %c0_i32 = arith.constant 0 : i32
    %c0_i32_0 = arith.constant 0 : i32
    %c0_i32_1 = arith.constant 0 : i32
    return %c0_i32, %c0_i32_0 : i32, i32
  }
  func.func @transform_2(%arg0: i32) -> (i32, i32) {
    %c0_i32 = arith.constant 0 : i32
    %c0_i32_0 = arith.constant 0 : i32
    %c0_i32_1 = arith.constant 0 : i32
    return %c0_i32, %c0_i32_0 : i32, i32
  }
  func.func @transform_3(%arg0: i32) -> (i32, i32) {
    %c0_i32 = arith.constant 0 : i32
    %c0_i32_0 = arith.constant 0 : i32
    return %arg0, %c0_i32 : i32, i32
  }
}

</mosaic_0001>

<llo_original>
// kernel: tpu_custom_call.1
$region0: #{tpu_custom_call.1}
  #allocation0 [shape = 'u32[]', space=smem, size = 0x4, offset = 0x4, fixed_abs, tag = 'smem constant byte address 0x4 - core index']
  #allocation1 [shape = 'u32[144,128]{1,0:T(1,128)}', space=vmem, size = 0x12000, scoped, tag = 'internal scratch']
  %s0 = inlined_call_operand.hbm [shape: f32[1,128], index: 0, kind: input, shape index: {}]
  %s1 = inlined_call_operand.vmem [shape: f32[1,128], index: 1, kind: input, shape index: {}]
  %s2 = inlined_call_operand.vmem [shape: f32[1,128], index: 2, kind: input, shape index: {}]
  %s3 = inlined_call_operand.hbm [shape: f32[2,128], index: 3, kind: output, shape index: {}]
  %s4 = sld [smem:[#allocation0]]
  $region26: #{tpu_custom_call.1} parent=0
    _
  %s6 = ssub.s32 1, %s4
  %s7 = scalar_select 0, %s6, %s4
  $region1: #{tpu_custom_call.1} parent=0
    #allocation2 [shape = 'u8[512]{0}', space=vmem, size = 0x400, scoped, tag = 'input window, operand 0, single buffered']
    #allocation3 [shape = 's32[1]{0}', space=sflag, size = 0x4, scoped, tag = 'scoped memory for tpu_custom_call.1']
    #allocation4 [shape = 's32[1]{0}', space=sflag, size = 0x4, scoped, tag = 'scoped memory for tpu_custom_call.1']
    #allocation5 [shape = 'u8[1024]{0}', space=vmem, size = 0x400, scoped, tag = 'output window, operand 0, single buffered']
    %8 = vsyncpa [#allocation3], 0
    %9 = vsyncpa [#allocation4], 0
    // Predicated region
    $region2: #{tpu_custom_call.1} parent=1 // pred_check
      _
    $region3: #{tpu_custom_call.1} parent=1 // pred_check_branch
      %11 = sbr.rel (0) target = $region5
    $region4: #{tpu_custom_call.1} parent=1 // pred_region
      %s13 = ssub.s32 16, 16
      %14 = vsyncadd [#allocation3], %s13
      %s16 = sshll.u32 [#allocation2], 4
      %s17 = int_to_ptr.vmem [resolvable:$true] %s16
      %19 = dma.hbm_to_vmem [thread:$0]  %s0, 16, %s17, [#allocation3]
    $region5: #{tpu_custom_call.1} parent=1 // pred_fallthru
      _
    // Predicated region
    $region6: #{tpu_custom_call.1} parent=1 // pred_check
      _
    $region7: #{tpu_custom_call.1} parent=1 // pred_check_branch
      %21 = sbr.rel (0) target = $region9
    $region8: #{tpu_custom_call.1} parent=1 // pred_region
      _
    $region9: #{tpu_custom_call.1} parent=1 // pred_fallthru
      _
    // Predicated region
    $region10: #{tpu_custom_call.1} parent=1 // pred_check
      _
    $region11: #{tpu_custom_call.1} parent=1 // pred_check_branch
      %23 = sbr.rel (0) target = $region13
    $region12: #{tpu_custom_call.1} parent=1 // pred_region
      _
    $region13: #{tpu_custom_call.1} parent=1 // pred_fallthru
      _
    // Predicated region
    $region14: #{tpu_custom_call.1} parent=1 // pred_check
      _
    $region15: #{tpu_custom_call.1} parent=1 // pred_check_branch
      %25 = sbr.rel (0) target = $region17
    $region16: #{tpu_custom_call.1} parent=1 // pred_region
      %26 = dma.done [#allocation3], 16
    $region17: #{tpu_custom_call.1} parent=1 // pred_fallthru
      _
    %s27 = smul.u32 0, 2
    %v28 = vlaneseq
    %v29 = vshrl.u32 %v28, 7
    %v30 = vstv %s27
    %v31 = vadd.s32 %v29, %v30
    %v32 = vcvt.s32.f32 %v31
    %v33 = vmul.f32 %v32, 4.0
    %v34 = vld [vmem:[%s2] sm:$0x1]
    %v36 = vlaneseq
    %v37 = vshrl.u32 %v36, 7
    %v38 = vsub.s32 0, %v37
    %v39 = vrot.slane %v34, %v38
    %v41 = vadd.f32 %v33, %v39
    %v42 = vld [vmem:[#allocation2] sm:$0x1]
    %v44 = vlaneseq
    %v45 = vshrl.u32 %v44, 7
    %v46 = vsub.s32 0, %v45
    %v47 = vrot.slane %v42, %v46
    %v49 = vmul.f32 %v41, %v47
    %v50 = vld [vmem:[%s1] sm:$0x1]
    %v52 = vlaneseq
    %v53 = vshrl.u32 %v52, 7
    %v54 = vsub.s32 0, %v53
    %v55 = vrot.slane %v50, %v54
    %v57 = vadd.f32 %v49, %v55
    %v58 = vand.u32 2147483647, %v57
    %vm59 = vcmp.le.f32.partialorder %v58, 0.7853982
    %vm60 = vcmp.lt.s32.totalorder %v57, 0
    %v61 = vand.u32 %v57, 2139095040
    %v62 = vshrl.u32 %v61, 23
    %v63 = vsub.s32 %v62, 127
    %v64 = vand.u32 2147483647, %v57
    %v65 = vand.u32 %v64, 8388607
    %v66 = vor.u32 %v65, 8388608
    %v67 = vsub.s32 0, %v66
    %v68 = vadd.s32 %v63, 1
    %vm69 = vcmp.gt.s32.totalorder %v68, 0
    %v70 = vsel %vm69, %v68, 0
    %v71 = vshrl.u32 %v70, 5
    %v72 = vand.u32 %v70, 31
    %v73 = vsub.s32 32, %v72
    %v74 = vshrl.u32 683565275, %v73
    %v75 = vshll.u32 683565275, %v72
    %v76 = vshrl.u32 2475754826, %v73
    %v77 = vor.u32 %v75, %v76
    %v78 = vshll.u32 2475754826, %v72
    %v79 = vshrl.u32 2131351028, %v73
    %v80 = vor.u32 %v78, %v79
    %v81 = vshll.u32 2131351028, %v72
    %v82 = vshrl.u32 2102212464, %v73
    %v83 = vor.u32 %v81, %v82
    %v84 = vshll.u32 2102212464, %v72
    %v85 = vshrl.u32 920167782, %v73
    %v86 = vor.u32 %v84, %v85
    %v87 = vshll.u32 920167782, %v72
    %v88 = vshrl.u32 1326507024, %v73
    %v89 = vor.u32 %v87, %v88
    %vm90 = vcmp.lt.s32.totalorder %v71, 1
    %vm91 = vcmp.lt.s32.totalorder %v71, 2
    %vm92 = vcmp.lt.s32.totalorder %v71, 3
    %vm93 = vcmp.lt.s32.totalorder %v71, 4
    %v94 = vsel %vm90, %v74, %v77
    %v95 = vsel %vm93, %v83, 2102212464
    %v96 = vsel %vm92, %v80, %v95
    %v97 = vsel %vm91, %v94, %v96
    %v98 = vsel %vm90, %v77, %v80
    %v99 = vsel %vm93, %v86, 920167782
    %v100 = vsel %vm92, %v83, %v99
    %v101 = vsel %vm91, %v98, %v100
    %v102 = vsel %vm90, %v80, %v83
    %v103 = vsel %vm93, %v89, 1326507024
    %v104 = vsel %vm92, %v86, %v103
    %v105 = vsel %vm91, %v102, %v104
    %v106 = vshll.u32 %v66, 8
    %v107 = vmul.u32.u64.compose %v106, %v105
    %v108 = vextract.low.u32 %v107
    %v109 = vextract.high.u32 %v107
    %v110 = vmul.u32.u64.compose %v106, %v101
    %v111 = vextract.low.u32 %v110
    %v112 = vextract.high.u32 %v110
    %v113 = vmul.u32 %v106, %v97
    %v114 = vadd.s32 %v109, %v111
    %vm115 = vc.u32 %v109, %v111
    %v116 = vadd.s32 %v112, 1
    %v117 = vsel %vm115, %v116, %v112
    %v118 = vadd.s32 %v113, %v117
    %v119 = vadd.s32 %v118, 536870912
    %v120 = vshrl.u32 %v119, 30
    %v121 = vshll.u32 %v120, 30
    %v122 = vsub.s32 %v118, %v121
    %vm123 = vcmp.lt.s32.totalorder %v122, 0
    %v124 = vsub.s32 0, %v122
    %v125 = vsel %vm123, %v124, %v122
    %v126 = vclz %v125
    %v127 = vsub.s32 %v126, 2
    %vm128 = vcmp.gt.s32.totalorder 0, %v127
    %v129 = vsel %vm128, 0, %v127
    %v130 = vsub.s32 32, %v129
    %v131 = vshll.u32 %v122, %v129
    %v132 = vshrl.u32 %v114, %v130
    %v133 = vor.u32 %v131, %v132
    %v134 = vsub.s32 4294967266, %v129
    %v135 = vadd.s32 %v134, 127
    %v136 = vshll.u32 %v135, 23
    %v137 = vor.u32 4788187, %v136
    %v138 = vand.u32 2147483647, %v137
    %v140 = vcvt.s32.f32 %v133
    %v141 = vmul.f32 %v140, %v138
    %v142 = vxor.u32 %v141, 2147483648
    %v143 = vsel %vm60, %v142, %v141
    %v144 = vsub.s32 4, %v120
    %v145 = vsel %vm60, %v144, %v120
    %v146 = vsel %vm59, %v57, %v143
    %v147 = vsel %vm59, 0, %v145
    %v148 = vcosq.f32.pop %v146
    %v149 = vsinq.f32.pop %v146
    %vm150 = vweird.f32 %v57
    %v151 = vadd.s32 %v147, 3
    %v152 = vand.u32 %v151, 3
    %vm153 = vcmp.lt.s32.totalorder %v152, 2
    %vm154 = vcmp.eq.s32.totalorder %v152, 0
    %v155 = vxor.u32 %v149, 2147483648
    %v156 = vsel %vm154, %v148, %v155
    %vm157 = vcmp.eq.s32.totalorder %v152, 2
    %v158 = vxor.u32 %v148, 2147483648
    %v159 = vsel %vm157, %v158, %v149
    %v160 = vsel %vm153, %v156, %v159
    %v161 = vsel %vm150, nan, %v160
    %162 = vst [vmem:[#allocation5] sm:$0x3] %v161
    // Predicated region
    $region18: #{tpu_custom_call.1} parent=1 // pred_check
      _
    $region19: #{tpu_custom_call.1} parent=1 // pred_check_branch
      %164 = sbr.rel (0) target = $region21
    $region20: #{tpu_custom_call.1} parent=1 // pred_region
      %s166 = ssub.s32 32, 32
      %167 = vsyncadd [#allocation4], %s166
      %s169 = sshll.u32 [#allocation5], 4
      %s170 = int_to_ptr.vmem [resolvable:$true] %s169
      %172 = dma.vmem_to_hbm [thread:$0]  %s170, 32, %s3, [#allocation4]
    $region21: #{tpu_custom_call.1} parent=1 // pred_fallthru
      _
    // Predicated region
    $region22: #{tpu_custom_call.1} parent=1 // pred_check
      _
    $region23: #{tpu_custom_call.1} parent=1 // pred_check_branch
      %174 = sbr.rel (0) target = $region25
    $region24: #{tpu_custom_call.1} parent=1 // pred_region
      %175 = dma.done [#allocation4], 32
    $region25: #{tpu_custom_call.1} parent=1 // pred_fallthru
      _
    %176 = vsyncpa [#allocation3], 1
    %177 = vsyncpa [#allocation4], 1

</llo_original>
